<compile_context>
chip_gen: v7x
topology: tpu7x:2x2x1
jax: 0.10.0
libtpu: 0.0.40
codegen_flags: <defaults>
</compile_context>

<pallas_src>
import functools
from typing import NamedTuple

import jax
import jax.numpy as jnp
from jax.experimental import pallas as pl
from jax.experimental.pallas import tpu as pltpu

BN_EPS = 1e-5        # nn.BatchNorm1d default
NORM_EPS = 1e-12     # F.normalize default
LANES = 128
SUBLANES = 8


class Layout(NamedTuple):
    din: int
    hid: int
    dout: int
    lanes: int        # slab lane width == padded output width
    off_w1: int
    off_w2: int
    off_w3: int
    off_vec: int


def _ceil_to(x, m):
    return ((x + m - 1) // m) * m


def prepare_params(params):
    """One-time preprocessing: pack every parameter into a single (rows, 128)
    f32 slab.  Each parameter block starts on an (8,128) tile boundary so the
    kernel can take static, tile-aligned views.  Linear weights are stored
    transposed ((in, out)); w3/b3 columns are zero-padded to 128 lanes."""
    w1 = jnp.asarray(params["w1"], jnp.float32)    # (H, Din)  torch layout
    w2 = jnp.asarray(params["w2"], jnp.float32)    # (H, H)
    w3 = jnp.asarray(params["w3"], jnp.float32)    # (Dout, H)
    hid, din = w1.shape
    dout = w3.shape[0]
    lanes = _ceil_to(max(hid, dout, 1), LANES)     # 128 for this model

    r_w1 = _ceil_to(din, SUBLANES)
    r_w2 = _ceil_to(hid, SUBLANES)
    r_w3 = _ceil_to(hid, SUBLANES)
    off_w1 = 0
    off_w2 = off_w1 + r_w1
    off_w3 = off_w2 + r_w2
    off_vec = off_w3 + r_w3
    rows = off_vec + SUBLANES                      # 7 vector rows + 1 pad row

    slab = jnp.zeros((rows, lanes), jnp.float32)
    slab = slab.at[off_w1:off_w1 + din, :hid].set(w1.T)
    slab = slab.at[off_w2:off_w2 + hid, :hid].set(w2.T)
    slab = slab.at[off_w3:off_w3 + hid, :dout].set(w3.T)   # lanes >= dout: zero pad
    vec_rows = [params["b1"], params["g1"], params["be1"],
                params["b2"], params["g2"], params["be2"], params["b3"]]
    for i, v in enumerate(vec_rows):
        v = jnp.asarray(v, jnp.float32).reshape(-1)
        slab = slab.at[off_vec + i, :v.shape[0]].set(v)

    layout = Layout(din=din, hid=hid, dout=dout, lanes=lanes,
                    off_w1=off_w1, off_w2=off_w2, off_w3=off_w3,
                    off_vec=off_vec)
    return slab, layout


def _make_kernel(B, layout):
    """Build the single-invocation kernel (all 3 siamese branches fused on the
    batch/sublane axis: rows [0,B) = anchor, [B,2B) = positive, [2B,3B) = neg)."""
    din, hid, lanes = layout.din, layout.hid, layout.lanes
    ow1, ow2, ow3, ov = (layout.off_w1, layout.off_w2,
                         layout.off_w3, layout.off_vec)
    R = 3 * B
    inv_b = 1.0 / B

    def kernel(x_ref, p_ref, o_ref):
        x = x_ref[...].astype(jnp.float32)                       # (3B, Din)

        # Static, tile-aligned views into the packed parameter slab.
        w1 = p_ref[ow1:ow1 + din, 0:hid]                         # (Din, H)
        w2 = p_ref[ow2:ow2 + hid, 0:hid]                         # (H, H)
        w3 = p_ref[ow3:ow3 + hid, 0:lanes]                       # (H, 128) zero-padded
        b1 = p_ref[ov + 0:ov + 1, 0:hid]
        g1 = p_ref[ov + 1:ov + 2, 0:hid]
        be1 = p_ref[ov + 2:ov + 3, 0:hid]
        b2 = p_ref[ov + 3:ov + 4, 0:hid]
        g2 = p_ref[ov + 4:ov + 5, 0:hid]
        be2 = p_ref[ov + 5:ov + 6, 0:hid]
        b3 = p_ref[ov + 6:ov + 7, 0:lanes]

        # Per-branch row-segment masks (layout-invariant: no (3,B,H) reshape).
        ridx = jax.lax.broadcasted_iota(jnp.int32, (R, 1), 0)
        masks = (
            (ridx < B).astype(jnp.float32),
            jnp.logical_and(ridx >= B, ridx < 2 * B).astype(jnp.float32),
            (ridx >= 2 * B).astype(jnp.float32),
        )

        def linear_bn_relu(h, w, bias, gamma, beta):
            # Linear for all 3 branches at once (single MXU matmul, M = 3B).
            y = jnp.dot(h, w, preferred_element_type=jnp.float32) + bias
            yy = y * y
            a_full = jnp.zeros_like(y)
            c_full = jnp.zeros_like(y)
            # Per-branch BatchNorm1d (training mode, biased batch variance),
            # folded into one FMA per element: y*a + c.
            for m in masks:                                     # unrolled x3
                s1 = jnp.sum(y * m, axis=0, keepdims=True)      # (1, H)
                s2 = jnp.sum(yy * m, axis=0, keepdims=True)     # (1, H)
                mean = s1 * inv_b
                var = jnp.maximum(s2 * inv_b - mean * mean, 0.0)
                a = gamma * jax.lax.rsqrt(var + BN_EPS)         # (1, H)
                c = beta - mean * a
                a_full = a_full + m * a
                c_full = c_full + m * c
            return jnp.maximum(y * a_full + c_full, 0.0)        # ReLU

        h = linear_bn_relu(x, w1, b1, g1, be1)
        h = linear_bn_relu(h, w2, b2, g2, be2)

        # linear3 + F.normalize(p=2, dim=1).  Padded output columns are exact
        # zeros (zero weights & bias), so they do not perturb the L2 norm.
        y = jnp.dot(h, w3, preferred_element_type=jnp.float32) + b3
        sumsq = jnp.sum(y * y, axis=1, keepdims=True)
        y = y * jax.lax.rsqrt(jnp.maximum(sumsq, NORM_EPS * NORM_EPS))

        o_ref[...] = y.astype(o_ref.dtype)                      # lane-dense store

    return kernel


@functools.partial(jax.jit, static_argnames=("layout",))
def siamese_forward(input_t, input_p, input_n, slab, layout):
    """SiameseNetwork.forward.  `slab, layout = prepare_params(torch_params)`."""
    B, din = input_t.shape
    hid, dout, lanes = layout.hid, layout.dout, layout.lanes

    # Fuse the three branches onto the batch axis: one input DMA.
    x = jnp.concatenate([input_t, input_p, input_n], axis=0)     # (3B, Din)

    itemsize = jnp.dtype(input_t.dtype).itemsize
    cost = pl.CostEstimate(
        flops=2 * 3 * B * (din * hid + hid * hid + hid * dout),
        transcendentals=2 * 3 * hid + 3 * B,
        bytes_accessed=(3 * B * din * itemsize            # input
                        + slab.size * 4                   # packed params
                        + 3 * B * lanes * itemsize),      # output
    )

    vmem = pl.BlockSpec(memory_space=pltpu.MemorySpace.VMEM)
    out = pl.pallas_call(
        _make_kernel(B, layout),
        out_shape=jax.ShapeDtypeStruct((3 * B, lanes), input_t.dtype),
        in_specs=[vmem, vmem],
        out_specs=vmem,
        cost_estimate=cost,
    )(x, slab)

    out = out[:, :dout]
    return out[0:B], out[B:2 * B], out[2 * B:3 * B]


def init_params(key, input_dim, hidden_dim, output_dim):
    """Deterministic synthetic parameters in PyTorch layouts."""
    ks = jax.random.split(key, 3)

    def lin(k, fan_in, fan_out):
        bound = 1.0 / jnp.sqrt(fan_in)
        kw, kb = jax.random.split(k)
        w = jax.random.uniform(kw, (fan_out, fan_in), jnp.float32, -bound, bound)
        b = jax.random.uniform(kb, (fan_out,), jnp.float32, -bound, bound)
        return w, b

    w1, b1 = lin(ks[0], input_dim, hidden_dim)
    w2, b2 = lin(ks[1], hidden_dim, hidden_dim)
    w3, b3 = lin(ks[2], hidden_dim, output_dim)
    g1 = jnp.ones((hidden_dim,), jnp.float32)
    be1 = jnp.zeros((hidden_dim,), jnp.float32)
    g2 = jnp.ones((hidden_dim,), jnp.float32)
    be2 = jnp.zeros((hidden_dim,), jnp.float32)
    return dict(w1=w1, b1=b1, g1=g1, be1=be1,
                w2=w2, b2=b2, g2=g2, be2=be2,
                w3=w3, b3=b3)


def _reference_forward_once(x, p):
    """Pure-JAX reference of forward_once (training-mode BN, two-pass var)."""
    def lbr(h, w, b, g, be):
        y = h @ w.T + b
        mean = jnp.mean(y, axis=0, keepdims=True)
        var = jnp.mean((y - mean) ** 2, axis=0, keepdims=True)
        y = (y - mean) / jnp.sqrt(var + BN_EPS) * g + be
        return jnp.maximum(y, 0.0)

    h = lbr(x, p["w1"], p["b1"], p["g1"], p["be1"])
    h = lbr(h, p["w2"], p["b2"], p["g2"], p["be2"])
    y = h @ p["w3"].T + p["b3"]
    n = jnp.sqrt(jnp.sum(y * y, axis=1, keepdims=True))
    return y / jnp.maximum(n, NORM_EPS)


if __name__ == "__main__":
    key = jax.random.PRNGKey(0)
    k_param, k_t, k_p, k_n = jax.random.split(key, 4)

    batch, input_dim, hidden_dim, output_dim = 8, 16, 32, 8
    params = init_params(k_param, input_dim, hidden_dim, output_dim)
    slab, layout = prepare_params(params)        # one-time parameter packing

    input_t = jax.random.normal(k_t, (batch, input_dim), jnp.float32)
    input_p = jax.random.normal(k_p, (batch, input_dim), jnp.float32)
    input_n = jax.random.normal(k_n, (batch, input_dim), jnp.float32)

    out_t, out_p, out_n = siamese_forward(input_t, input_p, input_n, slab, layout)
    jax.block_until_ready((out_t, out_p, out_n))

    # Sanity check against the pure-JAX reference.
    for got, inp in ((out_t, input_t), (out_p, input_p), (out_n, input_n)):
        ref = _reference_forward_once(inp, params)
        assert got.shape == (batch, output_dim)
        assert jnp.max(jnp.abs(got - ref)) < 1e-3

    print("KERNEL_OK")
</pallas_src>

<mosaic_0001>
module attributes {stable_mosaic.version = 11 : i64} {
  func.func @kernel(%arg0: memref<24x16xf32, #tpu.memory_space<vmem>>, %arg1: memref<88x128xf32, #tpu.memory_space<vmem>>, %arg2: memref<24x128xf32, #tpu.memory_space<vmem>>) attributes {dimension_semantics = [], scalar_prefetch = 0 : i64, scratch_operands = 0 : i64, tpu.core_type = #tpu.core_type<tc>} {
    %c0 = arith.constant 0 : index
    %c0_0 = arith.constant 0 : index
    %0 = vector.load %arg0[%c0, %c0_0] : memref<24x16xf32, #tpu.memory_space<vmem>>, vector<24x16xf32>
    %c0_1 = arith.constant 0 : index
    %c0_2 = arith.constant 0 : index
    %1 = vector.load %arg1[%c0_1, %c0_2] : memref<88x128xf32, #tpu.memory_space<vmem>>, vector<16x32xf32>
    %c16 = arith.constant 16 : index
    %c0_3 = arith.constant 0 : index
    %2 = vector.load %arg1[%c16, %c0_3] : memref<88x128xf32, #tpu.memory_space<vmem>>, vector<32x32xf32>
    %c48 = arith.constant 48 : index
    %c0_4 = arith.constant 0 : index
    %3 = vector.load %arg1[%c48, %c0_4] : memref<88x128xf32, #tpu.memory_space<vmem>>, vector<32x128xf32>
    %c80 = arith.constant 80 : index
    %c0_5 = arith.constant 0 : index
    %4 = vector.load %arg1[%c80, %c0_5] : memref<88x128xf32, #tpu.memory_space<vmem>>, vector<1x32xf32>
    %c81 = arith.constant 81 : index
    %c0_6 = arith.constant 0 : index
    %5 = vector.load %arg1[%c81, %c0_6] : memref<88x128xf32, #tpu.memory_space<vmem>>, vector<1x32xf32>
    %c82 = arith.constant 82 : index
    %c0_7 = arith.constant 0 : index
    %6 = vector.load %arg1[%c82, %c0_7] : memref<88x128xf32, #tpu.memory_space<vmem>>, vector<1x32xf32>
    %c83 = arith.constant 83 : index
    %c0_8 = arith.constant 0 : index
    %7 = vector.load %arg1[%c83, %c0_8] : memref<88x128xf32, #tpu.memory_space<vmem>>, vector<1x32xf32>
    %c84 = arith.constant 84 : index
    %c0_9 = arith.constant 0 : index
    %8 = vector.load %arg1[%c84, %c0_9] : memref<88x128xf32, #tpu.memory_space<vmem>>, vector<1x32xf32>
    %c85 = arith.constant 85 : index
    %c0_10 = arith.constant 0 : index
    %9 = vector.load %arg1[%c85, %c0_10] : memref<88x128xf32, #tpu.memory_space<vmem>>, vector<1x32xf32>
    %c86 = arith.constant 86 : index
    %c0_11 = arith.constant 0 : index
    %10 = vector.load %arg1[%c86, %c0_11] : memref<88x128xf32, #tpu.memory_space<vmem>>, vector<1x128xf32>
    %11 = tpu.iota {dimensions = array<i32: 0>} : vector<24x1xi32>
    %c8_i32 = arith.constant 8 : i32
    %12 = vector.broadcast %c8_i32 : i32 to vector<24x1xi32>
    %13 = arith.cmpi slt, %11, %12 : vector<24x1xi32>
    %14 = arith.extui %13 : vector<24x1xi1> to vector<24x1xi32>
    %15 = arith.sitofp %14 : vector<24x1xi32> to vector<24x1xf32>
    %c8_i32_12 = arith.constant 8 : i32
    %16 = vector.broadcast %c8_i32_12 : i32 to vector<24x1xi32>
    %17 = arith.cmpi sge, %11, %16 : vector<24x1xi32>
    %c16_i32 = arith.constant 16 : i32
    %18 = vector.broadcast %c16_i32 : i32 to vector<24x1xi32>
    %19 = arith.cmpi slt, %11, %18 : vector<24x1xi32>
    %20 = arith.andi %17, %19 : vector<24x1xi1>
    %21 = arith.extui %20 : vector<24x1xi1> to vector<24x1xi32>
    %22 = arith.sitofp %21 : vector<24x1xi32> to vector<24x1xf32>
    %c16_i32_13 = arith.constant 16 : i32
    %23 = vector.broadcast %c16_i32_13 : i32 to vector<24x1xi32>
    %24 = arith.cmpi sge, %11, %23 : vector<24x1xi32>
    %25 = arith.extui %24 : vector<24x1xi1> to vector<24x1xi32>
    %26 = arith.sitofp %25 : vector<24x1xi32> to vector<24x1xf32>
    %cst = arith.constant dense<0.000000e+00> : vector<24x32xf32>
    %27 = tpu.matmul %0, %1, %cst {dimension_numbers = #tpu.dot_dimension_numbers<[1], [0], [0], [1], [0, 0, 1, 1], [], []>} : vector<24x16xf32>, vector<16x32xf32>, vector<24x32xf32> -> vector<24x32xf32>
    %28 = vector.broadcast %4 : vector<1x32xf32> to vector<24x32xf32>
    %29 = arith.addf %27, %28 : vector<24x32xf32>
    %30 = arith.mulf %29, %29 : vector<24x32xf32>
    %cst_14 = arith.constant 0.000000e+00 : f32
    %31 = vector.broadcast %cst_14 : f32 to vector<24x32xf32>
    %cst_15 = arith.constant 0.000000e+00 : f32
    %32 = vector.broadcast %cst_15 : f32 to vector<24x32xf32>
    %33 = vector.broadcast %15 : vector<24x1xf32> to vector<24x32xf32>
    %34 = arith.mulf %29, %33 : vector<24x32xf32>
    %cst_16 = arith.constant dense<0.000000e+00> : vector<32xf32>
    %35 = vector.multi_reduction <add>, %34, %cst_16 [0] : vector<24x32xf32> to vector<32xf32>
    %36 = vector.shape_cast %35 : vector<32xf32> to vector<1x32xf32>
    %37 = vector.broadcast %15 : vector<24x1xf32> to vector<24x32xf32>
    %38 = arith.mulf %30, %37 : vector<24x32xf32>
    %cst_17 = arith.constant dense<0.000000e+00> : vector<32xf32>
    %39 = vector.multi_reduction <add>, %38, %cst_17 [0] : vector<24x32xf32> to vector<32xf32>
    %40 = vector.shape_cast %39 : vector<32xf32> to vector<1x32xf32>
    %cst_18 = arith.constant 1.250000e-01 : f32
    %41 = vector.broadcast %cst_18 : f32 to vector<1x32xf32>
    %42 = arith.mulf %36, %41 : vector<1x32xf32>
    %cst_19 = arith.constant 1.250000e-01 : f32
    %43 = vector.broadcast %cst_19 : f32 to vector<1x32xf32>
    %44 = arith.mulf %40, %43 : vector<1x32xf32>
    %45 = arith.mulf %42, %42 : vector<1x32xf32>
    %46 = arith.subf %44, %45 : vector<1x32xf32>
    %cst_20 = arith.constant 0.000000e+00 : f32
    %47 = vector.broadcast %cst_20 : f32 to vector<1x32xf32>
    %48 = arith.maximumf %46, %47 : vector<1x32xf32>
    %cst_21 = arith.constant 9.99999974E-6 : f32
    %49 = vector.broadcast %cst_21 : f32 to vector<1x32xf32>
    %50 = arith.addf %48, %49 : vector<1x32xf32>
    %51 = math.rsqrt %50 : vector<1x32xf32>
    %52 = arith.mulf %5, %51 : vector<1x32xf32>
    %53 = arith.mulf %42, %52 : vector<1x32xf32>
    %54 = arith.subf %6, %53 : vector<1x32xf32>
    %55 = vector.broadcast %15 : vector<24x1xf32> to vector<24x32xf32>
    %56 = vector.broadcast %52 : vector<1x32xf32> to vector<24x32xf32>
    %57 = arith.mulf %55, %56 : vector<24x32xf32>
    %58 = arith.addf %31, %57 : vector<24x32xf32>
    %59 = vector.broadcast %15 : vector<24x1xf32> to vector<24x32xf32>
    %60 = vector.broadcast %54 : vector<1x32xf32> to vector<24x32xf32>
    %61 = arith.mulf %59, %60 : vector<24x32xf32>
    %62 = arith.addf %32, %61 : vector<24x32xf32>
    %63 = vector.broadcast %22 : vector<24x1xf32> to vector<24x32xf32>
    %64 = arith.mulf %29, %63 : vector<24x32xf32>
    %cst_22 = arith.constant dense<0.000000e+00> : vector<32xf32>
    %65 = vector.multi_reduction <add>, %64, %cst_22 [0] : vector<24x32xf32> to vector<32xf32>
    %66 = vector.shape_cast %65 : vector<32xf32> to vector<1x32xf32>
    %67 = vector.broadcast %22 : vector<24x1xf32> to vector<24x32xf32>
    %68 = arith.mulf %30, %67 : vector<24x32xf32>
    %cst_23 = arith.constant dense<0.000000e+00> : vector<32xf32>
    %69 = vector.multi_reduction <add>, %68, %cst_23 [0] : vector<24x32xf32> to vector<32xf32>
    %70 = vector.shape_cast %69 : vector<32xf32> to vector<1x32xf32>
    %cst_24 = arith.constant 1.250000e-01 : f32
    %71 = vector.broadcast %cst_24 : f32 to vector<1x32xf32>
    %72 = arith.mulf %66, %71 : vector<1x32xf32>
    %cst_25 = arith.constant 1.250000e-01 : f32
    %73 = vector.broadcast %cst_25 : f32 to vector<1x32xf32>
    %74 = arith.mulf %70, %73 : vector<1x32xf32>
    %75 = arith.mulf %72, %72 : vector<1x32xf32>
    %76 = arith.subf %74, %75 : vector<1x32xf32>
    %cst_26 = arith.constant 0.000000e+00 : f32
    %77 = vector.broadcast %cst_26 : f32 to vector<1x32xf32>
    %78 = arith.maximumf %76, %77 : vector<1x32xf32>
    %cst_27 = arith.constant 9.99999974E-6 : f32
    %79 = vector.broadcast %cst_27 : f32 to vector<1x32xf32>
    %80 = arith.addf %78, %79 : vector<1x32xf32>
    %81 = math.rsqrt %80 : vector<1x32xf32>
    %82 = arith.mulf %5, %81 : vector<1x32xf32>
    %83 = arith.mulf %72, %82 : vector<1x32xf32>
    %84 = arith.subf %6, %83 : vector<1x32xf32>
    %85 = vector.broadcast %22 : vector<24x1xf32> to vector<24x32xf32>
    %86 = vector.broadcast %82 : vector<1x32xf32> to vector<24x32xf32>
    %87 = arith.mulf %85, %86 : vector<24x32xf32>
    %88 = arith.addf %58, %87 : vector<24x32xf32>
    %89 = vector.broadcast %22 : vector<24x1xf32> to vector<24x32xf32>
    %90 = vector.broadcast %84 : vector<1x32xf32> to vector<24x32xf32>
    %91 = arith.mulf %89, %90 : vector<24x32xf32>
    %92 = arith.addf %62, %91 : vector<24x32xf32>
    %93 = vector.broadcast %26 : vector<24x1xf32> to vector<24x32xf32>
    %94 = arith.mulf %29, %93 : vector<24x32xf32>
    %cst_28 = arith.constant dense<0.000000e+00> : vector<32xf32>
    %95 = vector.multi_reduction <add>, %94, %cst_28 [0] : vector<24x32xf32> to vector<32xf32>
    %96 = vector.shape_cast %95 : vector<32xf32> to vector<1x32xf32>
    %97 = vector.broadcast %26 : vector<24x1xf32> to vector<24x32xf32>
    %98 = arith.mulf %30, %97 : vector<24x32xf32>
    %cst_29 = arith.constant dense<0.000000e+00> : vector<32xf32>
    %99 = vector.multi_reduction <add>, %98, %cst_29 [0] : vector<24x32xf32> to vector<32xf32>
    %100 = vector.shape_cast %99 : vector<32xf32> to vector<1x32xf32>
    %cst_30 = arith.constant 1.250000e-01 : f32
    %101 = vector.broadcast %cst_30 : f32 to vector<1x32xf32>
    %102 = arith.mulf %96, %101 : vector<1x32xf32>
    %cst_31 = arith.constant 1.250000e-01 : f32
    %103 = vector.broadcast %cst_31 : f32 to vector<1x32xf32>
    %104 = arith.mulf %100, %103 : vector<1x32xf32>
    %105 = arith.mulf %102, %102 : vector<1x32xf32>
    %106 = arith.subf %104, %105 : vector<1x32xf32>
    %cst_32 = arith.constant 0.000000e+00 : f32
    %107 = vector.broadcast %cst_32 : f32 to vector<1x32xf32>
    %108 = arith.maximumf %106, %107 : vector<1x32xf32>
    %cst_33 = arith.constant 9.99999974E-6 : f32
    %109 = vector.broadcast %cst_33 : f32 to vector<1x32xf32>
    %110 = arith.addf %108, %109 : vector<1x32xf32>
    %111 = math.rsqrt %110 : vector<1x32xf32>
    %112 = arith.mulf %5, %111 : vector<1x32xf32>
    %113 = arith.mulf %102, %112 : vector<1x32xf32>
    %114 = arith.subf %6, %113 : vector<1x32xf32>
    %115 = vector.broadcast %26 : vector<24x1xf32> to vector<24x32xf32>
    %116 = vector.broadcast %112 : vector<1x32xf32> to vector<24x32xf32>
    %117 = arith.mulf %115, %116 : vector<24x32xf32>
    %118 = arith.addf %88, %117 : vector<24x32xf32>
    %119 = vector.broadcast %26 : vector<24x1xf32> to vector<24x32xf32>
    %120 = vector.broadcast %114 : vector<1x32xf32> to vector<24x32xf32>
    %121 = arith.mulf %119, %120 : vector<24x32xf32>
    %122 = arith.addf %92, %121 : vector<24x32xf32>
    %123 = arith.mulf %29, %118 : vector<24x32xf32>
    %124 = arith.addf %123, %122 : vector<24x32xf32>
    %cst_34 = arith.constant 0.000000e+00 : f32
    %125 = vector.broadcast %cst_34 : f32 to vector<24x32xf32>
    %126 = arith.maximumf %124, %125 : vector<24x32xf32>
    %cst_35 = arith.constant dense<0.000000e+00> : vector<24x32xf32>
    %127 = tpu.matmul %126, %2, %cst_35 {dimension_numbers = #tpu.dot_dimension_numbers<[1], [0], [0], [1], [0, 0, 1, 1], [], []>} : vector<24x32xf32>, vector<32x32xf32>, vector<24x32xf32> -> vector<24x32xf32>
    %128 = vector.broadcast %7 : vector<1x32xf32> to vector<24x32xf32>
    %129 = arith.addf %127, %128 : vector<24x32xf32>
    %130 = arith.mulf %129, %129 : vector<24x32xf32>
    %cst_36 = arith.constant 0.000000e+00 : f32
    %131 = vector.broadcast %cst_36 : f32 to vector<24x32xf32>
    %cst_37 = arith.constant 0.000000e+00 : f32
    %132 = vector.broadcast %cst_37 : f32 to vector<24x32xf32>
    %133 = vector.broadcast %15 : vector<24x1xf32> to vector<24x32xf32>
    %134 = arith.mulf %129, %133 : vector<24x32xf32>
    %cst_38 = arith.constant dense<0.000000e+00> : vector<32xf32>
    %135 = vector.multi_reduction <add>, %134, %cst_38 [0] : vector<24x32xf32> to vector<32xf32>
    %136 = vector.shape_cast %135 : vector<32xf32> to vector<1x32xf32>
    %137 = vector.broadcast %15 : vector<24x1xf32> to vector<24x32xf32>
    %138 = arith.mulf %130, %137 : vector<24x32xf32>
    %cst_39 = arith.constant dense<0.000000e+00> : vector<32xf32>
    %139 = vector.multi_reduction <add>, %138, %cst_39 [0] : vector<24x32xf32> to vector<32xf32>
    %140 = vector.shape_cast %139 : vector<32xf32> to vector<1x32xf32>
    %cst_40 = arith.constant 1.250000e-01 : f32
    %141 = vector.broadcast %cst_40 : f32 to vector<1x32xf32>
    %142 = arith.mulf %136, %141 : vector<1x32xf32>
    %cst_41 = arith.constant 1.250000e-01 : f32
    %143 = vector.broadcast %cst_41 : f32 to vector<1x32xf32>
    %144 = arith.mulf %140, %143 : vector<1x32xf32>
    %145 = arith.mulf %142, %142 : vector<1x32xf32>
    %146 = arith.subf %144, %145 : vector<1x32xf32>
    %cst_42 = arith.constant 0.000000e+00 : f32
    %147 = vector.broadcast %cst_42 : f32 to vector<1x32xf32>
    %148 = arith.maximumf %146, %147 : vector<1x32xf32>
    %cst_43 = arith.constant 9.99999974E-6 : f32
    %149 = vector.broadcast %cst_43 : f32 to vector<1x32xf32>
    %150 = arith.addf %148, %149 : vector<1x32xf32>
    %151 = math.rsqrt %150 : vector<1x32xf32>
    %152 = arith.mulf %8, %151 : vector<1x32xf32>
    %153 = arith.mulf %142, %152 : vector<1x32xf32>
    %154 = arith.subf %9, %153 : vector<1x32xf32>
    %155 = vector.broadcast %15 : vector<24x1xf32> to vector<24x32xf32>
    %156 = vector.broadcast %152 : vector<1x32xf32> to vector<24x32xf32>
    %157 = arith.mulf %155, %156 : vector<24x32xf32>
    %158 = arith.addf %131, %157 : vector<24x32xf32>
    %159 = vector.broadcast %15 : vector<24x1xf32> to vector<24x32xf32>
    %160 = vector.broadcast %154 : vector<1x32xf32> to vector<24x32xf32>
    %161 = arith.mulf %159, %160 : vector<24x32xf32>
    %162 = arith.addf %132, %161 : vector<24x32xf32>
    %163 = vector.broadcast %22 : vector<24x1xf32> to vector<24x32xf32>
    %164 = arith.mulf %129, %163 : vector<24x32xf32>
    %cst_44 = arith.constant dense<0.000000e+00> : vector<32xf32>
    %165 = vector.multi_reduction <add>, %164, %cst_44 [0] : vector<24x32xf32> to vector<32xf32>
    %166 = vector.shape_cast %165 : vector<32xf32> to vector<1x32xf32>
    %167 = vector.broadcast %22 : vector<24x1xf32> to vector<24x32xf32>
    %168 = arith.mulf %130, %167 : vector<24x32xf32>
    %cst_45 = arith.constant dense<0.000000e+00> : vector<32xf32>
    %169 = vector.multi_reduction <add>, %168, %cst_45 [0] : vector<24x32xf32> to vector<32xf32>
    %170 = vector.shape_cast %169 : vector<32xf32> to vector<1x32xf32>
    %cst_46 = arith.constant 1.250000e-01 : f32
    %171 = vector.broadcast %cst_46 : f32 to vector<1x32xf32>
    %172 = arith.mulf %166, %171 : vector<1x32xf32>
    %cst_47 = arith.constant 1.250000e-01 : f32
    %173 = vector.broadcast %cst_47 : f32 to vector<1x32xf32>
    %174 = arith.mulf %170, %173 : vector<1x32xf32>
    %175 = arith.mulf %172, %172 : vector<1x32xf32>
    %176 = arith.subf %174, %175 : vector<1x32xf32>
    %cst_48 = arith.constant 0.000000e+00 : f32
    %177 = vector.broadcast %cst_48 : f32 to vector<1x32xf32>
    %178 = arith.maximumf %176, %177 : vector<1x32xf32>
    %cst_49 = arith.constant 9.99999974E-6 : f32
    %179 = vector.broadcast %cst_49 : f32 to vector<1x32xf32>
    %180 = arith.addf %178, %179 : vector<1x32xf32>
    %181 = math.rsqrt %180 : vector<1x32xf32>
    %182 = arith.mulf %8, %181 : vector<1x32xf32>
    %183 = arith.mulf %172, %182 : vector<1x32xf32>
    %184 = arith.subf %9, %183 : vector<1x32xf32>
    %185 = vector.broadcast %22 : vector<24x1xf32> to vector<24x32xf32>
    %186 = vector.broadcast %182 : vector<1x32xf32> to vector<24x32xf32>
    %187 = arith.mulf %185, %186 : vector<24x32xf32>
    %188 = arith.addf %158, %187 : vector<24x32xf32>
    %189 = vector.broadcast %22 : vector<24x1xf32> to vector<24x32xf32>
    %190 = vector.broadcast %184 : vector<1x32xf32> to vector<24x32xf32>
    %191 = arith.mulf %189, %190 : vector<24x32xf32>
    %192 = arith.addf %162, %191 : vector<24x32xf32>
    %193 = vector.broadcast %26 : vector<24x1xf32> to vector<24x32xf32>
    %194 = arith.mulf %129, %193 : vector<24x32xf32>
    %cst_50 = arith.constant dense<0.000000e+00> : vector<32xf32>
    %195 = vector.multi_reduction <add>, %194, %cst_50 [0] : vector<24x32xf32> to vector<32xf32>
    %196 = vector.shape_cast %195 : vector<32xf32> to vector<1x32xf32>
    %197 = vector.broadcast %26 : vector<24x1xf32> to vector<24x32xf32>
    %198 = arith.mulf %130, %197 : vector<24x32xf32>
    %cst_51 = arith.constant dense<0.000000e+00> : vector<32xf32>
    %199 = vector.multi_reduction <add>, %198, %cst_51 [0] : vector<24x32xf32> to vector<32xf32>
    %200 = vector.shape_cast %199 : vector<32xf32> to vector<1x32xf32>
    %cst_52 = arith.constant 1.250000e-01 : f32
    %201 = vector.broadcast %cst_52 : f32 to vector<1x32xf32>
    %202 = arith.mulf %196, %201 : vector<1x32xf32>
    %cst_53 = arith.constant 1.250000e-01 : f32
    %203 = vector.broadcast %cst_53 : f32 to vector<1x32xf32>
    %204 = arith.mulf %200, %203 : vector<1x32xf32>
    %205 = arith.mulf %202, %202 : vector<1x32xf32>
    %206 = arith.subf %204, %205 : vector<1x32xf32>
    %cst_54 = arith.constant 0.000000e+00 : f32
    %207 = vector.broadcast %cst_54 : f32 to vector<1x32xf32>
    %208 = arith.maximumf %206, %207 : vector<1x32xf32>
    %cst_55 = arith.constant 9.99999974E-6 : f32
    %209 = vector.broadcast %cst_55 : f32 to vector<1x32xf32>
    %210 = arith.addf %208, %209 : vector<1x32xf32>
    %211 = math.rsqrt %210 : vector<1x32xf32>
    %212 = arith.mulf %8, %211 : vector<1x32xf32>
    %213 = arith.mulf %202, %212 : vector<1x32xf32>
    %214 = arith.subf %9, %213 : vector<1x32xf32>
    %215 = vector.broadcast %26 : vector<24x1xf32> to vector<24x32xf32>
    %216 = vector.broadcast %212 : vector<1x32xf32> to vector<24x32xf32>
    %217 = arith.mulf %215, %216 : vector<24x32xf32>
    %218 = arith.addf %188, %217 : vector<24x32xf32>
    %219 = vector.broadcast %26 : vector<24x1xf32> to vector<24x32xf32>
    %220 = vector.broadcast %214 : vector<1x32xf32> to vector<24x32xf32>
    %221 = arith.mulf %219, %220 : vector<24x32xf32>
    %222 = arith.addf %192, %221 : vector<24x32xf32>
    %223 = arith.mulf %129, %218 : vector<24x32xf32>
    %224 = arith.addf %223, %222 : vector<24x32xf32>
    %cst_56 = arith.constant 0.000000e+00 : f32
    %225 = vector.broadcast %cst_56 : f32 to vector<24x32xf32>
    %226 = arith.maximumf %224, %225 : vector<24x32xf32>
    %cst_57 = arith.constant dense<0.000000e+00> : vector<24x128xf32>
    %227 = tpu.matmul %226, %3, %cst_57 {dimension_numbers = #tpu.dot_dimension_numbers<[1], [0], [0], [1], [0, 0, 1, 1], [], []>} : vector<24x32xf32>, vector<32x128xf32>, vector<24x128xf32> -> vector<24x128xf32>
    %228 = vector.broadcast %10 : vector<1x128xf32> to vector<24x128xf32>
    %229 = arith.addf %227, %228 : vector<24x128xf32>
    %230 = arith.mulf %229, %229 : vector<24x128xf32>
    %cst_58 = arith.constant dense<0.000000e+00> : vector<24xf32>
    %231 = vector.multi_reduction <add>, %230, %cst_58 [1] : vector<24x128xf32> to vector<24xf32>
    %232 = vector.shape_cast %231 : vector<24xf32> to vector<24x1xf32>
    %cst_59 = arith.constant 1.000000e-24 : f32
    %233 = vector.broadcast %cst_59 : f32 to vector<24x1xf32>
    %234 = arith.maximumf %232, %233 : vector<24x1xf32>
    %235 = math.rsqrt %234 : vector<24x1xf32>
    %236 = vector.broadcast %235 : vector<24x1xf32> to vector<24x128xf32>
    %237 = arith.mulf %229, %236 : vector<24x128xf32>
    %c0_60 = arith.constant 0 : index
    %c0_61 = arith.constant 0 : index
    %238 = vector.load %arg2[%c0_60, %c0_61] : memref<24x128xf32, #tpu.memory_space<vmem>>, vector<24x128xf32>
    tpu.vector_store %arg2[%c0_60, %c0_61], %237 {strides = array<i32>} : memref<24x128xf32, #tpu.memory_space<vmem>>, vector<24x128xf32>,
    return
  }
}

</mosaic_0001>

<llo_original>
// kernel: siamese_forward.1
$region0: #{siamese_forward.1}
  #allocation0 [shape = 'u32[]', space=smem, size = 0x4, offset = 0x4, fixed_abs, tag = 'smem constant byte address 0x4 - core index']
  #allocation1 [shape = 'u32[144,128]{1,0:T(1,128)}', space=vmem, size = 0x12000, scoped, tag = 'internal scratch']
  %s0 = inlined_call_operand.vmem [shape: f32[24,16], index: 0, kind: input, shape index: {}]
  %s1 = inlined_call_operand.hbm [shape: f32[88,128], index: 1, kind: input, shape index: {}]
  %s2 = inlined_call_operand.vmem [shape: f32[24,128], index: 2, kind: output, shape index: {}]
  %s3 = sld [smem:[#allocation0]]
  $region22: #{siamese_forward.1} parent=0
    _
  %s5 = ssub.s32 1, %s3
  %s6 = scalar_select 0, %s5, %s3
  $region1: #{siamese_forward.1} parent=0
    #allocation2 [shape = 'u8[45056]{0}', space=vmem, size = 0xb000, scoped, tag = 'input window, operand 1, single buffered']
    #allocation3 [shape = 's32[1]{0}', space=sflag, size = 0x4, scoped, tag = 'scoped memory for siamese_forward.1']
    %7 = vsyncpa [#allocation3], 0
    // Predicated region
    $region2: #{siamese_forward.1} parent=1 // pred_check
      _
    $region3: #{siamese_forward.1} parent=1 // pred_check_branch
      %9 = sbr.rel (0) target = $region5
    $region4: #{siamese_forward.1} parent=1 // pred_region
      _
    $region5: #{siamese_forward.1} parent=1 // pred_fallthru
      _
    // Predicated region
    $region6: #{siamese_forward.1} parent=1 // pred_check
      _
    $region7: #{siamese_forward.1} parent=1 // pred_check_branch
      %11 = sbr.rel (0) target = $region9
    $region8: #{siamese_forward.1} parent=1 // pred_region
      %s13 = ssub.s32 1408, 1408
      %14 = vsyncadd [#allocation3], %s13
      %s15 = sshll.u32 [#allocation2], 4
      %s16 = int_to_ptr.vmem [resolvable:$true] %s15
      %21 = dma.hbm_to_vmem [thread:$0]  %s1, 1408, %s16, [#allocation3], 128, 128, 8
    $region9: #{siamese_forward.1} parent=1 // pred_fallthru
      _
    // Predicated region
    $region10: #{siamese_forward.1} parent=1 // pred_check
      _
    $region11: #{siamese_forward.1} parent=1 // pred_check_branch
      %23 = sbr.rel (0) target = $region13
    $region12: #{siamese_forward.1} parent=1 // pred_region
      %24 = dma.done [#allocation3], 1408
    $region13: #{siamese_forward.1} parent=1 // pred_fallthru
      _
    %v25 = vld [vmem:[%s0] sm:$0xff]
    %v26 = vld [vmem:[%s0 + $0x8] sm:$0xff]
    %v27 = vld [vmem:[%s0 + $0x10] sm:$0xff]
    %v28 = vld [vmem:[#allocation2] sm:$0xff]
    %v29 = vld [vmem:[#allocation2 + $0x8] sm:$0xff]
    %v30 = vld [vmem:[#allocation2 + $0x10] sm:$0xff]
    %v31 = vld [vmem:[#allocation2 + $0x18] sm:$0xff]
    %v32 = vld [vmem:[#allocation2 + $0x20] sm:$0xff]
    %v33 = vld [vmem:[#allocation2 + $0x28] sm:$0xff]
    %v34 = vld [vmem:[#allocation2 + $0x30] sm:$0xff]
    %v35 = vld [vmem:[#allocation2 + $0x38] sm:$0xff]
    %v36 = vld [vmem:[#allocation2 + $0x40] sm:$0xff]
    %v37 = vld [vmem:[#allocation2 + $0x48] sm:$0xff]
    %v38 = vld [vmem:[#allocation2 + $0x50] sm:$0x1]
    %v39 = vld [vmem:[#allocation2 + $0x51] sm:$0x1]
    %v40 = vld [vmem:[#allocation2 + $0x52] sm:$0x1]
    %v41 = vld [vmem:[#allocation2 + $0x53] sm:$0x1]
    %v42 = vld [vmem:[#allocation2 + $0x54] sm:$0x1]
    %v43 = vld [vmem:[#allocation2 + $0x55] sm:$0x1]
    %v44 = vld [vmem:[#allocation2 + $0x56] sm:$0x1]
    %v45 = vlaneseq
    %v46 = vshrl.u32 %v45, 7
    %v47 = vadd.s32 %v46, 8
    %v48 = vadd.s32 %v46, 16
    %vm49 = vcmp.lt.s32.totalorder %v46, 8
    %vm50 = vcmp.lt.s32.totalorder %v47, 8
    %vm51 = vcmp.lt.s32.totalorder %v48, 8
    %v52 = vsel %vm49, 1, 0
    %v53 = vsel %vm50, 1, 0
    %v54 = vsel %vm51, 1, 0
    %v55 = vcvt.s32.f32 %v52
    %v56 = vcvt.s32.f32 %v53
    %v57 = vcvt.s32.f32 %v54
    %vm58 = vcmp.ge.s32.totalorder %v46, 8
    %vm59 = vcmp.ge.s32.totalorder %v47, 8
    %vm60 = vcmp.ge.s32.totalorder %v48, 8
    %vm61 = vcmp.lt.s32.totalorder %v46, 16
    %vm62 = vcmp.lt.s32.totalorder %v47, 16
    %vm63 = vcmp.lt.s32.totalorder %v48, 16
    %vm64 = vmand %vm58, %vm61
    %vm65 = vmand %vm59, %vm62
    %vm66 = vmand %vm60, %vm63
    %v67 = vsel %vm64, 1, 0
    %v68 = vsel %vm65, 1, 0
    %v69 = vsel %vm66, 1, 0
    %v70 = vcvt.s32.f32 %v67
    %v71 = vcvt.s32.f32 %v68
    %v72 = vcvt.s32.f32 %v69
    %vm73 = vcmp.ge.s32.totalorder %v46, 16
    %vm74 = vcmp.ge.s32.totalorder %v47, 16
    %vm75 = vcmp.ge.s32.totalorder %v48, 16
    %v76 = vsel %vm73, 1, 0
    %v77 = vsel %vm74, 1, 0
    %v78 = vsel %vm75, 1, 0
    %v79 = vcvt.s32.f32 %v76
    %v80 = vcvt.s32.f32 %v77
    %v81 = vcvt.s32.f32 %v78
    %v82 = vlaneseq
    %v83 = vshrl.u32 %v82, 7
    %v84 = vsub.s32 0, %v83
    %v85 = vrot.slane %v38, %v84
    %vm86 = vcmask 130048
    %v88 = vsel %vm86, %v25, 0
    %v91 = vsel %vm86, %v26, 0
    %v94 = vsel %vm86, %v27, 0
    %96 = vmatprep.subr.mxu0 0.0
    %97 = vmatpush1.msra.mxu0 %v28
    %98 = vmatprep.subr.mxu0 0.0
    %99 = vmatpush1.msra.mxu0 %v29
    %100 = vmatprep.subr.mxu0 0.0
    %101 = vmatpush1.msra.mxu0 0.0
    %102 = vmatprep.subr.mxu0 0.0
    %103 = vmatpush1.msra.mxu0 0.0
    %104 = vmatprep.subr.mxu0 0.0
    %105 = vmatpush1.msra.mxu0 0.0
    %106 = vmatprep.subr.mxu0 0.0
    %107 = vmatpush1.msra.mxu0 0.0
    %108 = vmatprep.subr.mxu0 0.0
    %109 = vmatpush1.msra.mxu0 0.0
    %110 = vmatprep.subr.mxu0 0.0
    %111 = vmatpush1.msra.mxu0 0.0
    %112 = vmatprep.subr.mxu0 0.0
    %113 = vmatpush1.msra.mxu0 0.0
    %114 = vmatprep.subr.mxu0 0.0
    %115 = vmatpush1.msra.mxu0 0.0
    %116 = vmatprep.subr.mxu0 0.0
    %117 = vmatpush1.msra.mxu0 0.0
    %118 = vmatprep.subr.mxu0 0.0
    %119 = vmatpush1.msra.mxu0 0.0
    %120 = vmatprep.subr.mxu0 0.0
    %121 = vmatpush1.msra.mxu0 0.0
    %122 = vmatprep.subr.mxu0 0.0
    %123 = vmatpush1.msra.mxu0 0.0
    %124 = vmatprep.subr.mxu0 0.0
    %125 = vmatpush1.msra.mxu0 0.0
    %126 = vmatprep.subr.mxu0 0.0
    %127 = vmatpush1.msra.mxu0 0.0
    %128 = vmatprep.subr.mxu0 0.0
    %129 = vmatpush1.msra.mxu0 0.0
    %130 = vmatprep.subr.mxu0 0.0
    %131 = vmatpush1.msra.mxu0 0.0
    %132 = vmatprep.subr.mxu0 0.0
    %133 = vmatpush1.msra.mxu0 0.0
    %134 = vmatprep.subr.mxu0 0.0
    %135 = vmatpush1.msra.mxu0 0.0
    %136 = vmatprep.subr.mxu0 0.0
    %137 = vmatpush1.msra.mxu0 0.0
    %138 = vmatprep.subr.mxu0 0.0
    %139 = vmatpush1.msra.mxu0 0.0
    %140 = vmatprep.subr.mxu0 0.0
    %141 = vmatpush1.msra.mxu0 0.0
    %142 = vmatprep.subr.mxu0 0.0
    %143 = vmatpush1.msra.mxu0 0.0
    %144 = vmatprep.subr.mxu0 0.0
    %145 = vmatpush1.msra.mxu0 0.0
    %146 = vmatprep.subr.mxu0 0.0
    %147 = vmatpush1.msra.mxu0 0.0
    %148 = vmatprep.subr.mxu0 0.0
    %149 = vmatpush1.msra.mxu0 0.0
    %150 = vmatprep.subr.mxu0 0.0
    %151 = vmatpush1.msra.mxu0 0.0
    %152 = vmatprep.subr.mxu0 0.0
    %153 = vmatpush1.msra.mxu0 0.0
    %154 = vmatprep.subr.mxu0 0.0
    %155 = vmatpush1.msra.mxu0 0.0
    %156 = vmatprep.subr.mxu0 0.0
    %157 = vmatpush1.msra.mxu0 0.0
    %158 = vmatprep.subr.mxu0 0.0
    %159 = vmatpush1.msra.mxu0 0.0
    %160 = vmatprep.mubr.f32.mxu0 0.0
    %161 = vmatmul.mubr.f32.gmra.mrb[0].mxu0 %v88
    %v162 = vpop.f32.mrb[0].mxu0
    %v163 = vadd.f32 %v85, %v162
    %v164 = vpop.f32.mrb[0].mxu0
    %165 = vmatprep.mubr.f32.mxu0 0.0
    %166 = vmatmul.mubr.f32.gmra.mrb[0].mxu0 %v91
    %v167 = vpop.f32.mrb[0].mxu0
    %v168 = vadd.f32 %v85, %v167
    %v169 = vpop.f32.mrb[0].mxu0
    %170 = vmatprep.mubr.f32.mxu0 0.0
    %171 = vmatmul.mubr.f32.gmra.mrb[0].mxu0 %v94
    %v172 = vpop.f32.mrb[0].mxu0
    %v173 = vadd.f32 %v85, %v172
    %v174 = vpop.f32.mrb[0].mxu0
    %175 = vdwg.mxu0
    %v176 = vmul.f32 %v163, %v163
    %v177 = vmul.f32 %v168, %v168
    %v178 = vmul.f32 %v173, %v173
    %v179 = vmul.f32 %v163, %v55
    %v180 = vmul.f32 %v168, %v56
    %v181 = vmul.f32 %v173, %v57
    %vm182 = vcmask 261120
    %v183 = vsel %vm182, %v179, 0.0
    %v184 = vsel %vm182, %v180, 0.0
    %v185 = vadd.f32 %v183, %v184
    %v186 = vsel %vm182, %v181, 0.0
    %v187 = vadd.f32 %v185, %v186
    %v188 = vrot.slane %v187, 4
    %v189 = vadd.f32 %v187, %v188
    %v190 = vrot.slane %v189, 2
    %v191 = vadd.f32 %v189, %v190
    %v192 = vrot.slane %v191, 1
    %v193 = vadd.f32 %v191, %v192
    %v194 = vmul.f32 %v176, %v55
    %v195 = vmul.f32 %v177, %v56
    %v196 = vmul.f32 %v178, %v57
    %v197 = vsel %vm182, %v194, 0.0
    %v198 = vsel %vm182, %v195, 0.0
    %v199 = vadd.f32 %v197, %v198
    %v200 = vsel %vm182, %v196, 0.0
    %v201 = vadd.f32 %v199, %v200
    %v202 = vrot.slane %v201, 4
    %v203 = vadd.f32 %v201, %v202
    %v204 = vrot.slane %v203, 2
    %v205 = vadd.f32 %v203, %v204
    %v206 = vrot.slane %v205, 1
    %v207 = vadd.f32 %v205, %v206
    %v208 = vmul.f32 %v193, 0.125
    %v209 = vmul.f32 %v207, 0.125
    %v210 = vmul.f32 %v208, %v208
    %v211 = vsub.f32 %v209, %v210
    %v212 = vmax.f32 %v211, 0.0
    %v213 = vadd.f32 %v212, 1e-05
    %v214 = vrsqrt.pop %v213
    %v215 = vmul.f32 %v39, %v214
    %v216 = vmul.f32 %v208, %v215
    %v217 = vsub.f32 %v40, %v216
    %v218 = vlaneseq
    %v219 = vshrl.u32 %v218, 7
    %v220 = vsub.s32 0, %v219
    %v221 = vrot.slane %v215, %v220
    %v222 = vmul.f32 %v55, %v221
    %v223 = vmul.f32 %v56, %v221
    %v224 = vmul.f32 %v57, %v221
    %v225 = vadd.f32 %v222, 0.0
    %v226 = vadd.f32 %v223, 0.0
    %v227 = vadd.f32 %v224, 0.0
    %v228 = vlaneseq
    %v229 = vshrl.u32 %v228, 7
    %v230 = vsub.s32 0, %v229
    %v231 = vrot.slane %v217, %v230
    %v232 = vmul.f32 %v55, %v231
    %v233 = vmul.f32 %v56, %v231
    %v234 = vmul.f32 %v57, %v231
    %v235 = vadd.f32 %v232, 0.0
    %v236 = vadd.f32 %v233, 0.0
    %v237 = vadd.f32 %v234, 0.0
    %v238 = vmul.f32 %v163, %v70
    %v239 = vmul.f32 %v168, %v71
    %v240 = vmul.f32 %v173, %v72
    %v241 = vsel %vm182, %v238, 0.0
    %v242 = vsel %vm182, %v239, 0.0
    %v243 = vadd.f32 %v241, %v242
    %v244 = vsel %vm182, %v240, 0.0
    %v245 = vadd.f32 %v243, %v244
    %v246 = vrot.slane %v245, 4
    %v247 = vadd.f32 %v245, %v246
    %v248 = vrot.slane %v247, 2
    %v249 = vadd.f32 %v247, %v248
    %v250 = vrot.slane %v249, 1
    %v251 = vadd.f32 %v249, %v250
    %v252 = vmul.f32 %v176, %v70
    %v253 = vmul.f32 %v177, %v71
    %v254 = vmul.f32 %v178, %v72
    %v255 = vsel %vm182, %v252, 0.0
    %v256 = vsel %vm182, %v253, 0.0
    %v257 = vadd.f32 %v255, %v256
    %v258 = vsel %vm182, %v254, 0.0
    %v259 = vadd.f32 %v257, %v258
    %v260 = vrot.slane %v259, 4
    %v261 = vadd.f32 %v259, %v260
    %v262 = vrot.slane %v261, 2
    %v263 = vadd.f32 %v261, %v262
    %v264 = vrot.slane %v263, 1
    %v265 = vadd.f32 %v263, %v264
    %v266 = vmul.f32 %v251, 0.125
    %v267 = vmul.f32 %v265, 0.125
    %v268 = vmul.f32 %v266, %v266
    %v269 = vsub.f32 %v267, %v268
    %v270 = vmax.f32 %v269, 0.0
    %v271 = vadd.f32 %v270, 1e-05
    %v272 = vrsqrt.pop %v271
    %v273 = vmul.f32 %v39, %v272
    %v274 = vmul.f32 %v266, %v273
    %v275 = vsub.f32 %v40, %v274
    %v276 = vlaneseq
    %v277 = vshrl.u32 %v276, 7
    %v278 = vsub.s32 0, %v277
    %v279 = vrot.slane %v273, %v278
    %v280 = vmul.f32 %v70, %v279
    %v281 = vmul.f32 %v71, %v279
    %v282 = vmul.f32 %v72, %v279
    %v283 = vadd.f32 %v225, %v280
    %v284 = vadd.f32 %v226, %v281
    %v285 = vadd.f32 %v227, %v282
    %v286 = vlaneseq
    %v287 = vshrl.u32 %v286, 7
    %v288 = vsub.s32 0, %v287
    %v289 = vrot.slane %v275, %v288
    %v290 = vmul.f32 %v70, %v289
    %v291 = vmul.f32 %v71, %v289
    %v292 = vmul.f32 %v72, %v289
    %v293 = vadd.f32 %v235, %v290
    %v294 = vadd.f32 %v236, %v291
    %v295 = vadd.f32 %v237, %v292
    %v296 = vmul.f32 %v163, %v79
    %v297 = vmul.f32 %v168, %v80
    %v298 = vmul.f32 %v173, %v81
    %v299 = vsel %vm182, %v296, 0.0
    %v300 = vsel %vm182, %v297, 0.0
    %v301 = vadd.f32 %v299, %v300
    %v302 = vsel %vm182, %v298, 0.0
    %v303 = vadd.f32 %v301, %v302
    %v304 = vrot.slane %v303, 4
    %v305 = vadd.f32 %v303, %v304
    %v306 = vrot.slane %v305, 2
    %v307 = vadd.f32 %v305, %v306
    %v308 = vrot.slane %v307, 1
    %v309 = vadd.f32 %v307, %v308
    %v310 = vmul.f32 %v176, %v79
    %v311 = vmul.f32 %v177, %v80
    %v312 = vmul.f32 %v178, %v81
    %v313 = vsel %vm182, %v310, 0.0
    %v314 = vsel %vm182, %v311, 0.0
    %v315 = vadd.f32 %v313, %v314
    %v316 = vsel %vm182, %v312, 0.0
    %v317 = vadd.f32 %v315, %v316
    %v318 = vrot.slane %v317, 4
    %v319 = vadd.f32 %v317, %v318
    %v320 = vrot.slane %v319, 2
    %v321 = vadd.f32 %v319, %v320
    %v322 = vrot.slane %v321, 1
    %v323 = vadd.f32 %v321, %v322
    %v324 = vmul.f32 %v309, 0.125
    %v325 = vmul.f32 %v323, 0.125
    %v326 = vmul.f32 %v324, %v324
    %v327 = vsub.f32 %v325, %v326
    %v328 = vmax.f32 %v327, 0.0
    %v329 = vadd.f32 %v328, 1e-05
    %v330 = vrsqrt.pop %v329
    %v331 = vmul.f32 %v39, %v330
    %v332 = vmul.f32 %v324, %v331
    %v333 = vsub.f32 %v40, %v332
    %v334 = vlaneseq
    %v335 = vshrl.u32 %v334, 7
    %v336 = vsub.s32 0, %v335
    %v337 = vrot.slane %v331, %v336
    %v338 = vmul.f32 %v79, %v337
    %v339 = vmul.f32 %v80, %v337
    %v340 = vmul.f32 %v81, %v337
    %v341 = vadd.f32 %v283, %v338
    %v342 = vadd.f32 %v284, %v339
    %v343 = vadd.f32 %v285, %v340
    %v344 = vlaneseq
    %v345 = vshrl.u32 %v344, 7
    %v346 = vsub.s32 0, %v345
    %v347 = vrot.slane %v333, %v346
    %v348 = vmul.f32 %v79, %v347
    %v349 = vmul.f32 %v80, %v347
    %v350 = vmul.f32 %v81, %v347
    %v351 = vadd.f32 %v293, %v348
    %v352 = vadd.f32 %v294, %v349
    %v353 = vadd.f32 %v295, %v350
    %v354 = vmul.f32 %v163, %v341
    %v355 = vmul.f32 %v168, %v342
    %v356 = vmul.f32 %v173, %v343
    %v357 = vadd.f32 %v354, %v351
    %v358 = vadd.f32 %v355, %v352
    %v359 = vadd.f32 %v356, %v353
    %v360 = vmax.f32 %v357, 0.0
    %v361 = vmax.f32 %v358, 0.0
    %v362 = vmax.f32 %v359, 0.0
    %v363 = vlaneseq
    %v364 = vshrl.u32 %v363, 7
    %v365 = vsub.s32 0, %v364
    %v366 = vrot.slane %v41, %v365
    %v368 = vsel %vm182, %v360, 0
    %v371 = vsel %vm182, %v361, 0
    %v374 = vsel %vm182, %v362, 0
    %376 = vmatprep.subr.mxu0 0.0
    %377 = vmatpush1.msra.mxu0 %v30
    %378 = vmatprep.subr.mxu0 0.0
    %379 = vmatpush1.msra.mxu0 %v31
    %380 = vmatprep.subr.mxu0 0.0
    %381 = vmatpush1.msra.mxu0 %v32
    %382 = vmatprep.subr.mxu0 0.0
    %383 = vmatpush1.msra.mxu0 %v33
    %384 = vmatprep.subr.mxu0 0.0
    %385 = vmatpush1.msra.mxu0 0.0
    %386 = vmatprep.subr.mxu0 0.0
    %387 = vmatpush1.msra.mxu0 0.0
    %388 = vmatprep.subr.mxu0 0.0
    %389 = vmatpush1.msra.mxu0 0.0
    %390 = vmatprep.subr.mxu0 0.0
    %391 = vmatpush1.msra.mxu0 0.0
    %392 = vmatprep.subr.mxu0 0.0
    %393 = vmatpush1.msra.mxu0 0.0
    %394 = vmatprep.subr.mxu0 0.0
    %395 = vmatpush1.msra.mxu0 0.0
    %396 = vmatprep.subr.mxu0 0.0
    %397 = vmatpush1.msra.mxu0 0.0
    %398 = vmatprep.subr.mxu0 0.0
    %399 = vmatpush1.msra.mxu0 0.0
    %400 = vmatprep.subr.mxu0 0.0
    %401 = vmatpush1.msra.mxu0 0.0
    %402 = vmatprep.subr.mxu0 0.0
    %403 = vmatpush1.msra.mxu0 0.0
    %404 = vmatprep.subr.mxu0 0.0
    %405 = vmatpush1.msra.mxu0 0.0
    %406 = vmatprep.subr.mxu0 0.0
    %407 = vmatpush1.msra.mxu0 0.0
    %408 = vmatprep.subr.mxu0 0.0
    %409 = vmatpush1.msra.mxu0 0.0
    %410 = vmatprep.subr.mxu0 0.0
    %411 = vmatpush1.msra.mxu0 0.0
    %412 = vmatprep.subr.mxu0 0.0
    %413 = vmatpush1.msra.mxu0 0.0
    %414 = vmatprep.subr.mxu0 0.0
    %415 = vmatpush1.msra.mxu0 0.0
    %416 = vmatprep.subr.mxu0 0.0
    %417 = vmatpush1.msra.mxu0 0.0
    %418 = vmatprep.subr.mxu0 0.0
    %419 = vmatpush1.msra.mxu0 0.0
    %420 = vmatprep.subr.mxu0 0.0
    %421 = vmatpush1.msra.mxu0 0.0
    %422 = vmatprep.subr.mxu0 0.0
    %423 = vmatpush1.msra.mxu0 0.0
    %424 = vmatprep.subr.mxu0 0.0
    %425 = vmatpush1.msra.mxu0 0.0
    %426 = vmatprep.subr.mxu0 0.0
    %427 = vmatpush1.msra.mxu0 0.0
    %428 = vmatprep.subr.mxu0 0.0
    %429 = vmatpush1.msra.mxu0 0.0
    %430 = vmatprep.subr.mxu0 0.0
    %431 = vmatpush1.msra.mxu0 0.0
    %432 = vmatprep.subr.mxu0 0.0
    %433 = vmatpush1.msra.mxu0 0.0
    %434 = vmatprep.subr.mxu0 0.0
    %435 = vmatpush1.msra.mxu0 0.0
    %436 = vmatprep.subr.mxu0 0.0
    %437 = vmatpush1.msra.mxu0 0.0
    %438 = vmatprep.subr.mxu0 0.0
    %439 = vmatpush1.msra.mxu0 0.0
    %440 = vmatprep.mubr.f32.mxu0 0.0
    %441 = vmatmul.mubr.f32.gmra.mrb[0].mxu0 %v368
    %v442 = vpop.f32.mrb[0].mxu0
    %v443 = vadd.f32 %v366, %v442
    %v444 = vpop.f32.mrb[0].mxu0
    %445 = vmatprep.mubr.f32.mxu0 0.0
    %446 = vmatmul.mubr.f32.gmra.mrb[0].mxu0 %v371
    %v447 = vpop.f32.mrb[0].mxu0
    %v448 = vadd.f32 %v366, %v447
    %v449 = vpop.f32.mrb[0].mxu0
    %450 = vmatprep.mubr.f32.mxu0 0.0
    %451 = vmatmul.mubr.f32.gmra.mrb[0].mxu0 %v374
    %v452 = vpop.f32.mrb[0].mxu0
    %v453 = vadd.f32 %v366, %v452
    %v454 = vpop.f32.mrb[0].mxu0
    %455 = vdwg.mxu0
    %v456 = vmul.f32 %v443, %v443
    %v457 = vmul.f32 %v448, %v448
    %v458 = vmul.f32 %v453, %v453
    %v459 = vmul.f32 %v443, %v55
    %v460 = vmul.f32 %v448, %v56
    %v461 = vmul.f32 %v453, %v57
    %v462 = vsel %vm182, %v459, 0.0
    %v463 = vsel %vm182, %v460, 0.0
    %v464 = vadd.f32 %v462, %v463
    %v465 = vsel %vm182, %v461, 0.0
    %v466 = vadd.f32 %v464, %v465
    %v467 = vrot.slane %v466, 4
    %v468 = vadd.f32 %v466, %v467
    %v469 = vrot.slane %v468, 2
    %v470 = vadd.f32 %v468, %v469
    %v471 = vrot.slane %v470, 1
    %v472 = vadd.f32 %v470, %v471
    %v473 = vmul.f32 %v456, %v55
    %v474 = vmul.f32 %v457, %v56
    %v475 = vmul.f32 %v458, %v57
    %v476 = vsel %vm182, %v473, 0.0
    %v477 = vsel %vm182, %v474, 0.0
    %v478 = vadd.f32 %v476, %v477
    %v479 = vsel %vm182, %v475, 0.0
    %v480 = vadd.f32 %v478, %v479
    %v481 = vrot.slane %v480, 4
    %v482 = vadd.f32 %v480, %v481
    %v483 = vrot.slane %v482, 2
    %v484 = vadd.f32 %v482, %v483
    %v485 = vrot.slane %v484, 1
    %v486 = vadd.f32 %v484, %v485
    %v487 = vmul.f32 %v472, 0.125
    %v488 = vmul.f32 %v486, 0.125
    %v489 = vmul.f32 %v487, %v487
    %v490 = vsub.f32 %v488, %v489
    %v491 = vmax.f32 %v490, 0.0
    %v492 = vadd.f32 %v491, 1e-05
    %v493 = vrsqrt.pop %v492
    %v494 = vmul.f32 %v42, %v493
    %v495 = vmul.f32 %v487, %v494
    %v496 = vsub.f32 %v43, %v495
    %v497 = vlaneseq
    %v498 = vshrl.u32 %v497, 7
    %v499 = vsub.s32 0, %v498
    %v500 = vrot.slane %v494, %v499
    %v501 = vmul.f32 %v55, %v500
    %v502 = vmul.f32 %v56, %v500
    %v503 = vmul.f32 %v57, %v500
    %v504 = vadd.f32 %v501, 0.0
    %v505 = vadd.f32 %v502, 0.0
    %v506 = vadd.f32 %v503, 0.0
    %v507 = vlaneseq
    %v508 = vshrl.u32 %v507, 7
    %v509 = vsub.s32 0, %v508
    %v510 = vrot.slane %v496, %v509
    %v511 = vmul.f32 %v55, %v510
    %v512 = vmul.f32 %v56, %v510
    %v513 = vmul.f32 %v57, %v510
    %v514 = vadd.f32 %v511, 0.0
    %v515 = vadd.f32 %v512, 0.0
    %v516 = vadd.f32 %v513, 0.0
    %v517 = vmul.f32 %v443, %v70
    %v518 = vmul.f32 %v448, %v71
    %v519 = vmul.f32 %v453, %v72
    %v520 = vsel %vm182, %v517, 0.0
    %v521 = vsel %vm182, %v518, 0.0
    %v522 = vadd.f32 %v520, %v521
    %v523 = vsel %vm182, %v519, 0.0
    %v524 = vadd.f32 %v522, %v523
    %v525 = vrot.slane %v524, 4
    %v526 = vadd.f32 %v524, %v525
    %v527 = vrot.slane %v526, 2
    %v528 = vadd.f32 %v526, %v527
    %v529 = vrot.slane %v528, 1
    %v530 = vadd.f32 %v528, %v529
    %v531 = vmul.f32 %v456, %v70
    %v532 = vmul.f32 %v457, %v71
    %v533 = vmul.f32 %v458, %v72
    %v534 = vsel %vm182, %v531, 0.0
    %v535 = vsel %vm182, %v532, 0.0
    %v536 = vadd.f32 %v534, %v535
    %v537 = vsel %vm182, %v533, 0.0
    %v538 = vadd.f32 %v536, %v537
    %v539 = vrot.slane %v538, 4
    %v540 = vadd.f32 %v538, %v539
    %v541 = vrot.slane %v540, 2
    %v542 = vadd.f32 %v540, %v541
    %v543 = vrot.slane %v542, 1
    %v544 = vadd.f32 %v542, %v543
    %v545 = vmul.f32 %v530, 0.125
    %v546 = vmul.f32 %v544, 0.125
    %v547 = vmul.f32 %v545, %v545
    %v548 = vsub.f32 %v546, %v547
    %v549 = vmax.f32 %v548, 0.0
    %v550 = vadd.f32 %v549, 1e-05
    %v551 = vrsqrt.pop %v550
    %v552 = vmul.f32 %v42, %v551
    %v553 = vmul.f32 %v545, %v552
    %v554 = vsub.f32 %v43, %v553
    %v555 = vlaneseq
    %v556 = vshrl.u32 %v555, 7
    %v557 = vsub.s32 0, %v556
    %v558 = vrot.slane %v552, %v557
    %v559 = vmul.f32 %v70, %v558
    %v560 = vmul.f32 %v71, %v558
    %v561 = vmul.f32 %v72, %v558
    %v562 = vadd.f32 %v504, %v559
    %v563 = vadd.f32 %v505, %v560
    %v564 = vadd.f32 %v506, %v561
    %v565 = vlaneseq
    %v566 = vshrl.u32 %v565, 7
    %v567 = vsub.s32 0, %v566
    %v568 = vrot.slane %v554, %v567
    %v569 = vmul.f32 %v70, %v568
    %v570 = vmul.f32 %v71, %v568
    %v571 = vmul.f32 %v72, %v568
    %v572 = vadd.f32 %v514, %v569
    %v573 = vadd.f32 %v515, %v570
    %v574 = vadd.f32 %v516, %v571
    %v575 = vmul.f32 %v443, %v79
    %v576 = vmul.f32 %v448, %v80
    %v577 = vmul.f32 %v453, %v81
    %v578 = vsel %vm182, %v575, 0.0
    %v579 = vsel %vm182, %v576, 0.0
    %v580 = vadd.f32 %v578, %v579
    %v581 = vsel %vm182, %v577, 0.0
    %v582 = vadd.f32 %v580, %v581
    %v583 = vrot.slane %v582, 4
    %v584 = vadd.f32 %v582, %v583
    %v585 = vrot.slane %v584, 2
    %v586 = vadd.f32 %v584, %v585
    %v587 = vrot.slane %v586, 1
    %v588 = vadd.f32 %v586, %v587
    %v589 = vmul.f32 %v456, %v79
    %v590 = vmul.f32 %v457, %v80
    %v591 = vmul.f32 %v458, %v81
    %v592 = vsel %vm182, %v589, 0.0
    %v593 = vsel %vm182, %v590, 0.0
    %v594 = vadd.f32 %v592, %v593
    %v595 = vsel %vm182, %v591, 0.0
    %v596 = vadd.f32 %v594, %v595
    %v597 = vrot.slane %v596, 4
    %v598 = vadd.f32 %v596, %v597
    %v599 = vrot.slane %v598, 2
    %v600 = vadd.f32 %v598, %v599
    %v601 = vrot.slane %v600, 1
    %v602 = vadd.f32 %v600, %v601
    %v603 = vmul.f32 %v588, 0.125
    %v604 = vmul.f32 %v602, 0.125
    %v605 = vmul.f32 %v603, %v603
    %v606 = vsub.f32 %v604, %v605
    %v607 = vmax.f32 %v606, 0.0
    %v608 = vadd.f32 %v607, 1e-05
    %v609 = vrsqrt.pop %v608
    %v610 = vmul.f32 %v42, %v609
    %v611 = vmul.f32 %v603, %v610
    %v612 = vsub.f32 %v43, %v611
    %v613 = vlaneseq
    %v614 = vshrl.u32 %v613, 7
    %v615 = vsub.s32 0, %v614
    %v616 = vrot.slane %v610, %v615
    %v617 = vmul.f32 %v79, %v616
    %v618 = vmul.f32 %v80, %v616
    %v619 = vmul.f32 %v81, %v616
    %v620 = vadd.f32 %v562, %v617
    %v621 = vadd.f32 %v563, %v618
    %v622 = vadd.f32 %v564, %v619
    %v623 = vlaneseq
    %v624 = vshrl.u32 %v623, 7
    %v625 = vsub.s32 0, %v624
    %v626 = vrot.slane %v612, %v625
    %v627 = vmul.f32 %v79, %v626
    %v628 = vmul.f32 %v80, %v626
    %v629 = vmul.f32 %v81, %v626
    %v630 = vadd.f32 %v572, %v627
    %v631 = vadd.f32 %v573, %v628
    %v632 = vadd.f32 %v574, %v629
    %v633 = vmul.f32 %v443, %v620
    %v634 = vmul.f32 %v448, %v621
    %v635 = vmul.f32 %v453, %v622
    %v636 = vadd.f32 %v633, %v630
    %v637 = vadd.f32 %v634, %v631
    %v638 = vadd.f32 %v635, %v632
    %v639 = vmax.f32 %v636, 0.0
    %v640 = vmax.f32 %v637, 0.0
    %v641 = vmax.f32 %v638, 0.0
    %v642 = vlaneseq
    %v643 = vshrl.u32 %v642, 7
    %v644 = vsub.s32 0, %v643
    %v645 = vrot.slane %v44, %v644
    %v647 = vsel %vm182, %v639, 0
    %v650 = vsel %vm182, %v640, 0
    %v653 = vsel %vm182, %v641, 0
    %655 = vmatprep.subr.mxu0 0.0
    %656 = vmatpush1.msra.mxu0 %v34
    %657 = vmatprep.subr.mxu0 0.0
    %658 = vmatpush1.msra.mxu0 %v35
    %659 = vmatprep.subr.mxu0 0.0
    %660 = vmatpush1.msra.mxu0 %v36
    %661 = vmatprep.subr.mxu0 0.0
    %662 = vmatpush1.msra.mxu0 %v37
    %663 = vmatprep.subr.mxu0 0.0
    %664 = vmatpush1.msra.mxu0 0.0
    %665 = vmatprep.subr.mxu0 0.0
    %666 = vmatpush1.msra.mxu0 0.0
    %667 = vmatprep.subr.mxu0 0.0
    %668 = vmatpush1.msra.mxu0 0.0
    %669 = vmatprep.subr.mxu0 0.0
    %670 = vmatpush1.msra.mxu0 0.0
    %671 = vmatprep.subr.mxu0 0.0
    %672 = vmatpush1.msra.mxu0 0.0
    %673 = vmatprep.subr.mxu0 0.0
    %674 = vmatpush1.msra.mxu0 0.0
    %675 = vmatprep.subr.mxu0 0.0
    %676 = vmatpush1.msra.mxu0 0.0
    %677 = vmatprep.subr.mxu0 0.0
    %678 = vmatpush1.msra.mxu0 0.0
    %679 = vmatprep.subr.mxu0 0.0
    %680 = vmatpush1.msra.mxu0 0.0
    %681 = vmatprep.subr.mxu0 0.0
    %682 = vmatpush1.msra.mxu0 0.0
    %683 = vmatprep.subr.mxu0 0.0
    %684 = vmatpush1.msra.mxu0 0.0
    %685 = vmatprep.subr.mxu0 0.0
    %686 = vmatpush1.msra.mxu0 0.0
    %687 = vmatprep.subr.mxu0 0.0
    %688 = vmatpush1.msra.mxu0 0.0
    %689 = vmatprep.subr.mxu0 0.0
    %690 = vmatpush1.msra.mxu0 0.0
    %691 = vmatprep.subr.mxu0 0.0
    %692 = vmatpush1.msra.mxu0 0.0
    %693 = vmatprep.subr.mxu0 0.0
    %694 = vmatpush1.msra.mxu0 0.0
    %695 = vmatprep.subr.mxu0 0.0
    %696 = vmatpush1.msra.mxu0 0.0
    %697 = vmatprep.subr.mxu0 0.0
    %698 = vmatpush1.msra.mxu0 0.0
    %699 = vmatprep.subr.mxu0 0.0
    %700 = vmatpush1.msra.mxu0 0.0
    %701 = vmatprep.subr.mxu0 0.0
    %702 = vmatpush1.msra.mxu0 0.0
    %703 = vmatprep.subr.mxu0 0.0
    %704 = vmatpush1.msra.mxu0 0.0
    %705 = vmatprep.subr.mxu0 0.0
    %706 = vmatpush1.msra.mxu0 0.0
    %707 = vmatprep.subr.mxu0 0.0
    %708 = vmatpush1.msra.mxu0 0.0
    %709 = vmatprep.subr.mxu0 0.0
    %710 = vmatpush1.msra.mxu0 0.0
    %711 = vmatprep.subr.mxu0 0.0
    %712 = vmatpush1.msra.mxu0 0.0
    %713 = vmatprep.subr.mxu0 0.0
    %714 = vmatpush1.msra.mxu0 0.0
    %715 = vmatprep.subr.mxu0 0.0
    %716 = vmatpush1.msra.mxu0 0.0
    %717 = vmatprep.subr.mxu0 0.0
    %718 = vmatpush1.msra.mxu0 0.0
    %719 = vmatprep.mubr.f32.mxu0 0.0
    %720 = vmatmul.mubr.f32.gmra.mrb[0].mxu0 %v647
    %v721 = vpop.f32.mrb[0].mxu0
    %v722 = vadd.f32 %v645, %v721
    %v723 = vpop.f32.mrb[0].mxu0
    %724 = vmatprep.mubr.f32.mxu0 0.0
    %725 = vmatmul.mubr.f32.gmra.mrb[0].mxu0 %v650
    %v726 = vpop.f32.mrb[0].mxu0
    %v727 = vadd.f32 %v645, %v726
    %v728 = vpop.f32.mrb[0].mxu0
    %729 = vmatprep.mubr.f32.mxu0 0.0
    %730 = vmatmul.mubr.f32.gmra.mrb[0].mxu0 %v653
    %v731 = vpop.f32.mrb[0].mxu0
    %v732 = vadd.f32 %v645, %v731
    %v733 = vpop.f32.mrb[0].mxu0
    %734 = vdwg.mxu0
    %v735 = vmul.f32 %v722, %v722
    %v736 = vmul.f32 %v727, %v727
    %v737 = vmul.f32 %v732, %v732
    %738 = vadd.xlane.f32.xlu0 %v735
    %v739 = vpop.xlane.xlu0 %738
    %740 = vadd.xlane.f32.xlu0 %v736
    %v741 = vpop.xlane.xlu0 %740
    %742 = vadd.xlane.f32.xlu0 %v737
    %v743 = vpop.xlane.xlu0 %742
    %v744 = vmax.f32 %v739, 1e-24
    %v745 = vmax.f32 %v741, 1e-24
    %v746 = vmax.f32 %v743, 1e-24
    %v747 = vrsqrt.pop %v744
    %v748 = vrsqrt.pop %v745
    %v749 = vrsqrt.pop %v746
    %v750 = vmul.f32 %v722, %v747
    %v751 = vmul.f32 %v727, %v748
    %v752 = vmul.f32 %v732, %v749
    %753 = vst [vmem:[%s2] sm:$0xff] %v750
    %754 = vst [vmem:[%s2 + $0x8] sm:$0xff] %v751
    %755 = vst [vmem:[%s2 + $0x10] sm:$0xff] %v752
    // Predicated region
    $region14: #{siamese_forward.1} parent=1 // pred_check
      _
    $region15: #{siamese_forward.1} parent=1 // pred_check_branch
      %757 = sbr.rel (0) target = $region17
    $region16: #{siamese_forward.1} parent=1 // pred_region
      _
    $region17: #{siamese_forward.1} parent=1 // pred_fallthru
      _
    // Predicated region
    $region18: #{siamese_forward.1} parent=1 // pred_check
      _
    $region19: #{siamese_forward.1} parent=1 // pred_check_branch
      %759 = sbr.rel (0) target = $region21
    $region20: #{siamese_forward.1} parent=1 // pred_region
      _
    $region21: #{siamese_forward.1} parent=1 // pred_fallthru
      _
    %760 = vsyncpa [#allocation3], 1

</llo_original>
